<compile_context>
chip_gen: v7x
topology: tpu7x:2x2x1
jax: 0.10.0
libtpu: 0.0.40
codegen_flags: <defaults>
</compile_context>

<pallas_src>
import functools

import jax
import jax.numpy as jnp
from jax.experimental import pallas as pl
from jax.experimental.pallas import tpu as pltpu

COEFF = 0.95
EPS = 1e-10


def _esr_rows_kernel(x_ref, t_ref, loss_ref, *, coeff):
    # x_ref / t_ref : (tile_bc, T) blocks in VMEM.  loss_ref : (tile_bc, 1) per-row losses.
    x = x_ref[...].astype(jnp.float32)
    tg = t_ref[...].astype(jnp.float32)

    # Pre-emphasis: y[0] = a[0]; y[t] = a[t] - coeff*a[t-1] for t >= 1.
    # 'tail' covers t = 1..T-1 via static slices; 'head' is the untouched t = 0 column.
    y_tail = x[:, 1:] - coeff * x[:, :-1]        # (tile_bc, T-1)
    yp_tail = tg[:, 1:] - coeff * tg[:, :-1]     # (tile_bc, T-1)
    e_tail = y_tail - yp_tail
    e_head = x[:, :1] - tg[:, :1]                # (tile_bc, 1)
    y_head = x[:, :1]                            # (tile_bc, 1)

    num = jnp.sum(e_tail * e_tail, axis=-1, keepdims=True) + e_head * e_head
    den = jnp.sum(y_tail * y_tail, axis=-1, keepdims=True) + y_head * y_head + EPS
    loss_ref[...] = num / den


def _round_up(n, m):
    return ((n + m - 1) // m) * m


def _pick_tile_bc(bc, t, itemsize, max_tile_bc=None):
    # Keep one (tile_bc, T) input block around <= 2 MiB so that
    # 2 inputs x 2 pipeline buffers + f32 temporaries fit the 32 MiB scoped VMEM request.
    row_bytes = max(t * itemsize, 1)
    tile = (2 * 1024 * 1024) // row_bytes
    tile = max(8, (tile // 8) * 8)               # multiple of 8 sublanes
    if max_tile_bc is not None:
        tile = max(8, min(tile, (max_tile_bc // 8) * 8))
    return min(tile, _round_up(bc, 8))


def esr_loss(x, target, coeff=COEFF, reduction="mean", max_tile_bc=None):
    """x, target: (B, C, T). Returns scalar ('mean'/'sum') or (B, C) ('none')."""
    assert x.shape == target.shape and x.ndim == 3
    B, C, T = x.shape
    BC = B * C
    x2d = x.reshape(BC, T)
    t2d = target.reshape(BC, T)

    itemsize = jnp.dtype(x.dtype).itemsize
    tile_bc = _pick_tile_bc(BC, T, itemsize, max_tile_bc)
    bc_pad = _round_up(BC, tile_bc)
    if bc_pad != BC:
        pad = bc_pad - BC
        x2d = jnp.pad(x2d, ((0, pad), (0, 0)))
        t2d = jnp.pad(t2d, ((0, pad), (0, 0)))

    grid = (bc_pad // tile_bc,)
    kernel = functools.partial(_esr_rows_kernel, coeff=coeff)

    per_row = pl.pallas_call(
        kernel,
        out_shape=jax.ShapeDtypeStruct((bc_pad, 1), jnp.float32),
        grid=grid,
        in_specs=[
            pl.BlockSpec((tile_bc, T), lambda i: (i, 0)),
            pl.BlockSpec((tile_bc, T), lambda i: (i, 0)),
        ],
        out_specs=pl.BlockSpec((tile_bc, 1), lambda i: (i, 0)),
        compiler_params=pltpu.CompilerParams(
            dimension_semantics=("parallel",),
            vmem_limit_bytes=32 * 1024 * 1024,
        ),
        cost_estimate=pl.CostEstimate(
            flops=10 * bc_pad * T,
            transcendentals=0,
            bytes_accessed=2 * bc_pad * T * itemsize + bc_pad * 4,
        ),
    )(x2d, t2d)

    # Drop padded rows (they evaluate to 0 but would bias the mean's divisor).
    losses = per_row[:BC, 0]
    if reduction == "mean":
        return jnp.mean(losses)
    if reduction == "sum":
        return jnp.sum(losses)
    if reduction == "none":
        return losses.reshape(B, C)
    raise ValueError(f"unknown reduction: {reduction}")


def _esr_loss_ref(x, target, coeff=COEFF):
    """Pure-JAX reference mirroring the PyTorch module exactly."""
    def pre_emph(a):
        return jnp.concatenate([a[:, :, 0:1], a[:, :, 1:] - coeff * a[:, :, :-1]], axis=2)

    y = pre_emph(x)
    yp = pre_emph(target)
    losses = jnp.sum((y - yp) ** 2, axis=2) / (jnp.sum(y ** 2, axis=2) + EPS)
    return jnp.mean(losses)


if __name__ == "__main__":
    key = jax.random.PRNGKey(0)
    k1, k2 = jax.random.split(key)
    B, C, T = 3, 5, 384  # small (batch, channel, time) audio-style shapes
    x = jax.random.normal(k1, (B, C, T), dtype=jnp.float32)
    target = x + 0.1 * jax.random.normal(k2, (B, C, T), dtype=jnp.float32)

    ref = jax.block_until_ready(_esr_loss_ref(x, target))

    # Default tiling (single grid step at these toy shapes).
    loss = jax.block_until_ready(esr_loss(x, target))
    assert jnp.allclose(loss, ref, rtol=1e-5, atol=1e-6), (loss, ref)

    # Forced small row tile: exercises the multi-step grid + row-padding path.
    loss_tiled = jax.block_until_ready(esr_loss(x, target, max_tile_bc=8))
    assert jnp.allclose(loss_tiled, ref, rtol=1e-5, atol=1e-6), (loss_tiled, ref)

    print("KERNEL_OK")
</pallas_src>

<mosaic_0001>
module attributes {stable_mosaic.version = 11 : i64} {
  func.func @_esr_rows_kernel(%arg0: i32, %arg1: memref<16x384xf32, #tpu.memory_space<vmem>>, %arg2: memref<16x384xf32, #tpu.memory_space<vmem>>, %arg3: memref<16x1xf32, #tpu.memory_space<vmem>>) attributes {dimension_semantics = [#tpu.dimension_semantics<parallel>], iteration_bounds = array<i64: 1>, scalar_prefetch = 0 : i64, scratch_operands = 0 : i64, tpu.core_type = #tpu.core_type<tc>, window_params = [{transform_indices = @transform_0, window_bounds = array<i64: 16, 384>}, {transform_indices = @transform_1, window_bounds = array<i64: 16, 384>}, {transform_indices = @transform_2, window_bounds = array<i64: 16, 1>}]} {
    %c0 = arith.constant 0 : index
    %c0_0 = arith.constant 0 : index
    %0 = vector.load %arg1[%c0, %c0_0] : memref<16x384xf32, #tpu.memory_space<vmem>>, vector<16x384xf32>
    %c0_1 = arith.constant 0 : index
    %c0_2 = arith.constant 0 : index
    %1 = vector.load %arg2[%c0_1, %c0_2] : memref<16x384xf32, #tpu.memory_space<vmem>>, vector<16x384xf32>
    %2 = vector.extract_strided_slice %0 {offsets = [0, 1], sizes = [16, 383], strides = [1, 1]} : vector<16x384xf32> to vector<16x383xf32>
    %3 = vector.extract_strided_slice %0 {offsets = [0, 0], sizes = [16, 383], strides = [1, 1]} : vector<16x384xf32> to vector<16x383xf32>
    %cst = arith.constant 0.949999988 : f32
    %4 = vector.broadcast %cst : f32 to vector<16x383xf32>
    %5 = arith.mulf %4, %3 : vector<16x383xf32>
    %6 = arith.subf %2, %5 : vector<16x383xf32>
    %7 = vector.extract_strided_slice %1 {offsets = [0, 1], sizes = [16, 383], strides = [1, 1]} : vector<16x384xf32> to vector<16x383xf32>
    %8 = vector.extract_strided_slice %1 {offsets = [0, 0], sizes = [16, 383], strides = [1, 1]} : vector<16x384xf32> to vector<16x383xf32>
    %cst_3 = arith.constant 0.949999988 : f32
    %9 = vector.broadcast %cst_3 : f32 to vector<16x383xf32>
    %10 = arith.mulf %9, %8 : vector<16x383xf32>
    %11 = arith.subf %7, %10 : vector<16x383xf32>
    %12 = arith.subf %6, %11 : vector<16x383xf32>
    %13 = vector.extract_strided_slice %0 {offsets = [0, 0], sizes = [16, 1], strides = [1, 1]} : vector<16x384xf32> to vector<16x1xf32>
    %14 = vector.extract_strided_slice %1 {offsets = [0, 0], sizes = [16, 1], strides = [1, 1]} : vector<16x384xf32> to vector<16x1xf32>
    %15 = arith.subf %13, %14 : vector<16x1xf32>
    %16 = vector.extract_strided_slice %0 {offsets = [0, 0], sizes = [16, 1], strides = [1, 1]} : vector<16x384xf32> to vector<16x1xf32>
    %17 = arith.mulf %12, %12 : vector<16x383xf32>
    %cst_4 = arith.constant dense<0.000000e+00> : vector<16xf32>
    %18 = vector.multi_reduction <add>, %17, %cst_4 [1] : vector<16x383xf32> to vector<16xf32>
    %19 = vector.shape_cast %18 : vector<16xf32> to vector<16x1xf32>
    %20 = arith.mulf %15, %15 : vector<16x1xf32>
    %21 = arith.addf %19, %20 : vector<16x1xf32>
    %22 = arith.mulf %6, %6 : vector<16x383xf32>
    %cst_5 = arith.constant dense<0.000000e+00> : vector<16xf32>
    %23 = vector.multi_reduction <add>, %22, %cst_5 [1] : vector<16x383xf32> to vector<16xf32>
    %24 = vector.shape_cast %23 : vector<16xf32> to vector<16x1xf32>
    %25 = arith.mulf %16, %16 : vector<16x1xf32>
    %26 = arith.addf %24, %25 : vector<16x1xf32>
    %cst_6 = arith.constant 1.000000e-10 : f32
    %27 = vector.broadcast %cst_6 : f32 to vector<16x1xf32>
    %28 = arith.addf %26, %27 : vector<16x1xf32>
    %29 = arith.divf %21, %28 : vector<16x1xf32>
    %c0_7 = arith.constant 0 : index
    %c0_8 = arith.constant 0 : index
    %30 = vector.load %arg3[%c0_7, %c0_8] : memref<16x1xf32, #tpu.memory_space<vmem>>, vector<16x1xf32>
    tpu.vector_store %arg3[%c0_7, %c0_8], %29 {strides = array<i32>} : memref<16x1xf32, #tpu.memory_space<vmem>>, vector<16x1xf32>,
    return
  }
  func.func @transform_0(%arg0: i32) -> (i32, i32) {
    %c0_i32 = arith.constant 0 : i32
    %c0_i32_0 = arith.constant 0 : i32
    return %arg0, %c0_i32 : i32, i32
  }
  func.func @transform_1(%arg0: i32) -> (i32, i32) {
    %c0_i32 = arith.constant 0 : i32
    %c0_i32_0 = arith.constant 0 : i32
    return %arg0, %c0_i32 : i32, i32
  }
  func.func @transform_2(%arg0: i32) -> (i32, i32) {
    %c0_i32 = arith.constant 0 : i32
    %c0_i32_0 = arith.constant 0 : i32
    return %arg0, %c0_i32 : i32, i32
  }
}

</mosaic_0001>

<llo_original>
// kernel: tpu_custom_call.1
$region0: #{tpu_custom_call.1}
  #allocation0 [shape = 'u32[]', space=smem, size = 0x4, offset = 0x4, fixed_abs, tag = 'smem constant byte address 0x4 - core index']
  #allocation1 [shape = 'u32[144,128]{1,0:T(1,128)}', space=vmem, size = 0x12000, scoped, tag = 'internal scratch']
  %s0 = inlined_call_operand.hbm [shape: f32[16,384], index: 0, kind: input, shape index: {}]
  %s1 = inlined_call_operand.hbm [shape: f32[16,384], index: 1, kind: input, shape index: {}]
  %s2 = inlined_call_operand.vmem [shape: f32[16,1], index: 2, kind: output, shape index: {}]
  %s3 = sld [smem:[#allocation0]]
  $region26: #{tpu_custom_call.1} parent=0
    _
  %s5 = ssub.s32 1, %s3
  %s6 = scalar_select 0, %s5, %s3
  $region1: #{tpu_custom_call.1} parent=0
    #allocation2 [shape = 'u8[24576]{0}', space=vmem, size = 0x6000, scoped, tag = 'input window, operand 0, single buffered']
    #allocation3 [shape = 's32[1]{0}', space=sflag, size = 0x4, scoped, tag = 'scoped memory for tpu_custom_call.1']
    #allocation4 [shape = 'u8[24576]{0}', space=vmem, size = 0x6000, scoped, tag = 'input window, operand 1, single buffered']
    #allocation5 [shape = 's32[1]{0}', space=sflag, size = 0x4, scoped, tag = 'scoped memory for tpu_custom_call.1']
    %7 = vsyncpa [#allocation3], 0
    %8 = vsyncpa [#allocation5], 0
    // Predicated region
    $region2: #{tpu_custom_call.1} parent=1 // pred_check
      _
    $region3: #{tpu_custom_call.1} parent=1 // pred_check_branch
      %10 = sbr.rel (0) target = $region5
    $region4: #{tpu_custom_call.1} parent=1 // pred_region
      %s12 = ssub.s32 768, 768
      %13 = vsyncadd [#allocation3], %s12
      %s14 = sshll.u32 [#allocation2], 4
      %s15 = int_to_ptr.vmem [resolvable:$true] %s14
      %20 = dma.hbm_to_vmem [thread:$0]  %s0, 768, %s15, [#allocation3], 384, 384, 24
    $region5: #{tpu_custom_call.1} parent=1 // pred_fallthru
      _
    // Predicated region
    $region6: #{tpu_custom_call.1} parent=1 // pred_check
      _
    $region7: #{tpu_custom_call.1} parent=1 // pred_check_branch
      %22 = sbr.rel (0) target = $region9
    $region8: #{tpu_custom_call.1} parent=1 // pred_region
      %s24 = ssub.s32 768, 768
      %25 = vsyncadd [#allocation5], %s24
      %s26 = sshll.u32 [#allocation4], 4
      %s27 = int_to_ptr.vmem [resolvable:$true] %s26
      %32 = dma.hbm_to_vmem [thread:$0]  %s1, 768, %s27, [#allocation5], 384, 384, 24
    $region9: #{tpu_custom_call.1} parent=1 // pred_fallthru
      _
    // Predicated region
    $region10: #{tpu_custom_call.1} parent=1 // pred_check
      _
    $region11: #{tpu_custom_call.1} parent=1 // pred_check_branch
      %34 = sbr.rel (0) target = $region13
    $region12: #{tpu_custom_call.1} parent=1 // pred_region
      %35 = dma.done [#allocation3], 768
    $region13: #{tpu_custom_call.1} parent=1 // pred_fallthru
      _
    // Predicated region
    $region14: #{tpu_custom_call.1} parent=1 // pred_check
      _
    $region15: #{tpu_custom_call.1} parent=1 // pred_check_branch
      %37 = sbr.rel (0) target = $region17
    $region16: #{tpu_custom_call.1} parent=1 // pred_region
      %38 = dma.done [#allocation5], 768
    $region17: #{tpu_custom_call.1} parent=1 // pred_fallthru
      _
    %v39 = vld [vmem:[#allocation2] sm:$0xff]
    %v40 = vld [vmem:[#allocation2 + $0x8] sm:$0xff]
    %v41 = vld [vmem:[#allocation2 + $0x10] sm:$0xff]
    %v42 = vld [vmem:[#allocation2 + $0x18] sm:$0xff]
    %v43 = vld [vmem:[#allocation2 + $0x20] sm:$0xff]
    %v44 = vld [vmem:[#allocation2 + $0x28] sm:$0xff]
    %v45 = vld [vmem:[#allocation4] sm:$0xff]
    %v46 = vld [vmem:[#allocation4 + $0x8] sm:$0xff]
    %v47 = vld [vmem:[#allocation4 + $0x10] sm:$0xff]
    %v48 = vld [vmem:[#allocation4 + $0x18] sm:$0xff]
    %v49 = vld [vmem:[#allocation4 + $0x20] sm:$0xff]
    %v50 = vld [vmem:[#allocation4 + $0x28] sm:$0xff]
    %v51 = vmul.f32 %v39, 0.95
    %v52 = vmul.f32 %v40, 0.95
    %v53 = vmul.f32 %v41, 0.95
    %v54 = vmul.f32 %v42, 0.95
    %v55 = vmul.f32 %v43, 0.95
    %v56 = vmul.f32 %v44, 0.95
    %63 = vrot.lane.b32.xlu0 %v51, 1
    %v64 = vpop.permute.xlu0 %63
    %65 = vrot.lane.b32.xlu0 %v52, 1
    %v66 = vpop.permute.xlu0 %65
    %67 = vrot.lane.b32.xlu0 %v53, 1
    %v68 = vpop.permute.xlu0 %67
    %69 = vrot.lane.b32.xlu0 %v54, 1
    %v70 = vpop.permute.xlu0 %69
    %71 = vrot.lane.b32.xlu0 %v55, 1
    %v72 = vpop.permute.xlu0 %71
    %73 = vrot.lane.b32.xlu0 %v56, 1
    %v74 = vpop.permute.xlu0 %73
    %vm75 = vcmask 7168
    %v76 = vsel %vm75, %v64, %v66
    %v77 = vsel %vm75, %v66, %v68
    %v78 = vsel %vm75, %v70, %v72
    %v79 = vsel %vm75, %v72, %v74
    %v86 = vsub.f32 %v39, %v64
    %v87 = vsub.f32 %v40, %v76
    %v88 = vsub.f32 %v41, %v77
    %v89 = vsub.f32 %v42, %v70
    %v90 = vsub.f32 %v43, %v78
    %v91 = vsub.f32 %v44, %v79
    %v92 = vmul.f32 %v45, 0.95
    %v93 = vmul.f32 %v46, 0.95
    %v94 = vmul.f32 %v47, 0.95
    %v95 = vmul.f32 %v48, 0.95
    %v96 = vmul.f32 %v49, 0.95
    %v97 = vmul.f32 %v50, 0.95
    %104 = vrot.lane.b32.xlu0 %v92, 1
    %v105 = vpop.permute.xlu0 %104
    %106 = vrot.lane.b32.xlu0 %v93, 1
    %v107 = vpop.permute.xlu0 %106
    %108 = vrot.lane.b32.xlu0 %v94, 1
    %v109 = vpop.permute.xlu0 %108
    %110 = vrot.lane.b32.xlu0 %v95, 1
    %v111 = vpop.permute.xlu0 %110
    %112 = vrot.lane.b32.xlu0 %v96, 1
    %v113 = vpop.permute.xlu0 %112
    %114 = vrot.lane.b32.xlu0 %v97, 1
    %v115 = vpop.permute.xlu0 %114
    %v116 = vsel %vm75, %v105, %v107
    %v117 = vsel %vm75, %v107, %v109
    %v118 = vsel %vm75, %v111, %v113
    %v119 = vsel %vm75, %v113, %v115
    %v126 = vsub.f32 %v45, %v105
    %v127 = vsub.f32 %v46, %v116
    %v128 = vsub.f32 %v47, %v117
    %v129 = vsub.f32 %v48, %v111
    %v130 = vsub.f32 %v49, %v118
    %v131 = vsub.f32 %v50, %v119
    %v132 = vsub.f32 %v86, %v126
    %v133 = vsub.f32 %v87, %v127
    %v134 = vsub.f32 %v88, %v128
    %v135 = vsub.f32 %v89, %v129
    %v136 = vsub.f32 %v90, %v130
    %v137 = vsub.f32 %v91, %v131
    %v138 = vsub.f32 %v39, %v45
    %v139 = vsub.f32 %v42, %v48
    %v140 = vmul.f32 %v132, %v132
    %v141 = vmul.f32 %v133, %v133
    %v142 = vmul.f32 %v134, %v134
    %v143 = vmul.f32 %v135, %v135
    %v144 = vmul.f32 %v136, %v136
    %v145 = vmul.f32 %v137, %v137
    %152 = vrot.lane.b32.xlu0 %v140, 127
    %v153 = vpop.permute.xlu0 %152
    %154 = vrot.lane.b32.xlu0 %v141, 127
    %v155 = vpop.permute.xlu0 %154
    %156 = vrot.lane.b32.xlu0 %v142, 127
    %v157 = vpop.permute.xlu0 %156
    %158 = vrot.lane.b32.xlu0 %v143, 127
    %v159 = vpop.permute.xlu0 %158
    %160 = vrot.lane.b32.xlu0 %v144, 127
    %v161 = vpop.permute.xlu0 %160
    %162 = vrot.lane.b32.xlu0 %v145, 127
    %v163 = vpop.permute.xlu0 %162
    %vm164 = vcmask 1039360
    %v165 = vsel %vm164, %v153, %v155
    %v166 = vsel %vm164, %v155, %v157
    %v167 = vsel %vm164, %v159, %v161
    %v168 = vsel %vm164, %v161, %v163
    %v175 = vadd.f32 %v165, %v166
    %v176 = vsel %vm164, %v157, 0.0
    %v177 = vadd.f32 %v175, %v176
    %178 = vadd.xlane.f32.xlu0 %v177
    %v179 = vpop.xlane.xlu0 %178
    %v180 = vadd.f32 %v167, %v168
    %v181 = vsel %vm164, %v163, 0.0
    %v182 = vadd.f32 %v180, %v181
    %183 = vadd.xlane.f32.xlu0 %v182
    %v184 = vpop.xlane.xlu0 %183
    %v185 = vmul.f32 %v138, %v138
    %v186 = vmul.f32 %v139, %v139
    %v187 = vadd.f32 %v179, %v185
    %v188 = vadd.f32 %v184, %v186
    %v189 = vmul.f32 %v86, %v86
    %v190 = vmul.f32 %v87, %v87
    %v191 = vmul.f32 %v88, %v88
    %v192 = vmul.f32 %v89, %v89
    %v193 = vmul.f32 %v90, %v90
    %v194 = vmul.f32 %v91, %v91
    %201 = vrot.lane.b32.xlu0 %v189, 127
    %v202 = vpop.permute.xlu0 %201
    %203 = vrot.lane.b32.xlu0 %v190, 127
    %v204 = vpop.permute.xlu0 %203
    %205 = vrot.lane.b32.xlu0 %v191, 127
    %v206 = vpop.permute.xlu0 %205
    %207 = vrot.lane.b32.xlu0 %v192, 127
    %v208 = vpop.permute.xlu0 %207
    %209 = vrot.lane.b32.xlu0 %v193, 127
    %v210 = vpop.permute.xlu0 %209
    %211 = vrot.lane.b32.xlu0 %v194, 127
    %v212 = vpop.permute.xlu0 %211
    %v213 = vsel %vm164, %v202, %v204
    %v214 = vsel %vm164, %v204, %v206
    %v215 = vsel %vm164, %v208, %v210
    %v216 = vsel %vm164, %v210, %v212
    %v223 = vadd.f32 %v213, %v214
    %v224 = vsel %vm164, %v206, 0.0
    %v225 = vadd.f32 %v223, %v224
    %226 = vadd.xlane.f32.xlu0 %v225
    %v227 = vpop.xlane.xlu0 %226
    %v228 = vadd.f32 %v215, %v216
    %v229 = vsel %vm164, %v212, 0.0
    %v230 = vadd.f32 %v228, %v229
    %231 = vadd.xlane.f32.xlu0 %v230
    %v232 = vpop.xlane.xlu0 %231
    %v233 = vmul.f32 %v39, %v39
    %v234 = vmul.f32 %v42, %v42
    %v235 = vadd.f32 %v227, %v233
    %v236 = vadd.f32 %v232, %v234
    %v237 = vadd.f32 %v235, 1e-10
    %v238 = vadd.f32 %v236, 1e-10
    %v239 = vrcp.pop %v237
    %v240 = vmul.f32 %v187, %v239
    %v241 = vrcp.pop %v238
    %v242 = vmul.f32 %v188, %v241
    %243 = vst.msk [vmem:[%s2] sm:$0xff] %vm75, %v240
    %244 = vst.msk [vmem:[%s2 + $0x8] sm:$0xff] %vm75, %v242
    // Predicated region
    $region18: #{tpu_custom_call.1} parent=1 // pred_check
      _
    $region19: #{tpu_custom_call.1} parent=1 // pred_check_branch
      %246 = sbr.rel (0) target = $region21
    $region20: #{tpu_custom_call.1} parent=1 // pred_region
      _
    $region21: #{tpu_custom_call.1} parent=1 // pred_fallthru
      _
    // Predicated region
    $region22: #{tpu_custom_call.1} parent=1 // pred_check
      _
    $region23: #{tpu_custom_call.1} parent=1 // pred_check_branch
      %248 = sbr.rel (0) target = $region25
    $region24: #{tpu_custom_call.1} parent=1 // pred_region
      _
    $region25: #{tpu_custom_call.1} parent=1 // pred_fallthru
      _
    %249 = vsyncpa [#allocation3], 1
    %250 = vsyncpa [#allocation5], 1

</llo_original>
